<compile_context>
chip_gen: v5e
topology: v5e:2x2
jax: 0.10.0
libtpu: 0.0.40
codegen_flags: <defaults>
</compile_context>

<pallas_src>
import jax
import jax.numpy as jnp
from jax.experimental import pallas as pl
from jax.experimental.pallas import tpu as pltpu

BOX_SIZE = 7         # self.box_size / cfg['BOX_SIZE']
MAX_MERGE_NUMS = 8   # cfg['MAX_MERGE_NUMS'] (max_c of MergeNet)
HIDDEN_C = 16        # MergeNet hidden_c


def _mergenet_kernel(x_ref, w1_ref, b1_ref, w2_ref, b2_ref, w3_ref, b3_ref,
                     out_ref):
    # x_ref: (K, Nt) bf16 column tile; each column is one (group, box-dim) pair.
    x = x_ref[...]                                                     # (K, Nt) bf16
    h1 = jnp.dot(w1_ref[...], x, preferred_element_type=jnp.float32)
    h1 = jnp.maximum(h1 + b1_ref[...], 0.0)                            # (H, Nt) f32
    # Dropout(p=0.2) is identity in eval mode.
    h2 = jnp.dot(w2_ref[...], h1.astype(jnp.bfloat16),
                 preferred_element_type=jnp.float32)
    h2 = jnp.maximum(h2 + b2_ref[...], 0.0)                            # (H, Nt) f32
    out = jnp.dot(w3_ref[...], h2.astype(jnp.bfloat16),
                  preferred_element_type=jnp.float32)
    out_ref[...] = out + b3_ref[...]                                   # (1, Nt) f32


def _pick_tile(n_cols, n_tile):
    """Column-tile width: multiple of 128, >=2 grid steps whenever possible,
    no gross over-padding of tiny inputs."""
    n_tile = max(128, (n_tile // 128) * 128)
    # Cap at ~half the columns so v7x's two TensorCores both get work.
    half = pl.cdiv(pl.cdiv(n_cols, 2), 128) * 128
    return max(128, min(n_tile, half))


def mergenet_forward_cols(x_cols, params, n_tile=32768):
    """MergeNet over a (K, N) column matrix (column n = flattened (group, dim)).

    Returns the merged-box rows as (1, N) float32.  This is the preferred
    entry point when the producer can emit the (K, B*D) layout directly.
    """
    K, N = x_cols.shape
    H = params["w1"].shape[0]

    n_tile = _pick_tile(N, n_tile)
    grid = (pl.cdiv(N, n_tile),)          # ragged final block handled by Pallas

    x_cols = x_cols.astype(jnp.bfloat16)

    # nn.Linear stores weight as (out, in) — exactly the LHS we want for W @ X.
    # Dot operands go to the MXU as bf16; biases / elementwise math stay f32.
    w1 = params["w1"].astype(jnp.bfloat16)                    # (H, K)
    w2 = params["w2"].astype(jnp.bfloat16)                    # (H, H)
    w3 = params["w3"].astype(jnp.bfloat16)                    # (1, H)
    b1 = params["b1"].reshape(H, 1).astype(jnp.float32)
    b2 = params["b2"].reshape(H, 1).astype(jnp.float32)
    b3 = params["b3"].reshape(1, 1).astype(jnp.float32)

    n_work = grid[0] * n_tile
    cost = pl.CostEstimate(
        flops=2 * (K * H + H * H + H) * n_work,
        transcendentals=0,
        bytes_accessed=2 * K * n_work + 4 * n_work
        + 2 * (H * K + H * H + H) + 4 * (2 * H + 1),
    )

    out = pl.pallas_call(
        _mergenet_kernel,
        out_shape=jax.ShapeDtypeStruct((1, N), jnp.float32),
        grid_spec=pltpu.PrefetchScalarGridSpec(
            num_scalar_prefetch=0,
            grid=grid,
            in_specs=[
                pl.BlockSpec((K, n_tile), lambda i: (0, i)),   # activations
                # TODO(synk): the six tiny param blocks could be packed / moved
                # to SMEM; negligible bandwidth, left as-is (low priority).
                pl.BlockSpec((H, K), lambda i: (0, 0)),        # W1
                pl.BlockSpec((H, 1), lambda i: (0, 0)),        # b1
                pl.BlockSpec((H, H), lambda i: (0, 0)),        # W2
                pl.BlockSpec((H, 1), lambda i: (0, 0)),        # b2
                pl.BlockSpec((1, H), lambda i: (0, 0)),        # W3
                pl.BlockSpec((1, 1), lambda i: (0, 0)),        # b3
            ],
            out_specs=pl.BlockSpec((1, n_tile), lambda i: (0, i)),
        ),
        compiler_params=pltpu.CompilerParams(
            dimension_semantics=("parallel",)),
        cost_estimate=cost,
    )(x_cols, w1, b1, w2, b2, w3, b3)

    return out


def mergenet_forward(x, params, n_tile=32768):
    """x: (B, K, D) float32 groups of overlap boxes.  Returns (B, 1, D)."""
    B, K, D = x.shape
    N = B * D
    # Single layout-plumbing copy, fused with the bf16 downcast (half-size temp):
    # (B, K, D) -> (K, B*D).
    x_cols = jnp.transpose(x.astype(jnp.bfloat16), (1, 0, 2)).reshape(K, N)
    out = mergenet_forward_cols(x_cols, params, n_tile=n_tile)
    # (1, N) -> (B, 1, D): pure reshape, no transpose, no padding to strip.
    return out.reshape(B, 1, D)


def init_mergenet_params(key, max_c=MAX_MERGE_NUMS, hidden_c=HIDDEN_C):
    k1, k2, k3, k4, k5, k6 = jax.random.split(key, 6)
    def lin(kw, kb, fan_in, fan_out):
        bound = 1.0 / jnp.sqrt(fan_in)
        w = jax.random.uniform(kw, (fan_out, fan_in), jnp.float32, -bound, bound)
        b = jax.random.uniform(kb, (fan_out,), jnp.float32, -bound, bound)
        return w, b
    w1, b1 = lin(k1, k2, max_c, hidden_c)
    w2, b2 = lin(k3, k4, hidden_c, hidden_c)
    w3, b3 = lin(k5, k6, hidden_c, 1)
    return {"w1": w1, "b1": b1, "w2": w2, "b2": b2, "w3": w3, "b3": b3}


def _mergenet_ref(x, p):
    # Pure-JAX f32 reference of MergeNet.forward (dropout = identity).
    xt = jnp.transpose(x, (0, 2, 1))
    h = jnp.maximum(jnp.einsum("bdk,hk->bdh", xt, p["w1"]) + p["b1"], 0.0)
    h = jnp.maximum(jnp.einsum("bdh,gh->bdg", h, p["w2"]) + p["b2"], 0.0)
    o = jnp.einsum("bdh,oh->bdo", h, p["w3"]) + p["b3"]
    return jnp.transpose(o, (0, 2, 1))


if __name__ == "__main__":
    key = jax.random.PRNGKey(0)
    kp, kx1, kx2 = jax.random.split(key, 3)
    params = init_mergenet_params(kp)

    # Small case: 4 groups of overlapping boxes, each (MAX_MERGE_NUMS, BOX_SIZE).
    B = 4
    x = jax.random.normal(kx1, (B, MAX_MERGE_NUMS, BOX_SIZE), jnp.float32)
    merge_boxes = jax.block_until_ready(mergenet_forward(x, params))
    assert merge_boxes.shape == (B, 1, BOX_SIZE)
    # bf16 MXU operands -> ~1e-3..1e-2 level deviation from the f32 reference.
    assert jnp.allclose(merge_boxes, _mergenet_ref(x, params),
                        atol=3e-2, rtol=3e-2)

    # Larger case exercising >=2 grid steps and a ragged (masked-store) tail tile.
    B2 = 100
    x2 = jax.random.normal(kx2, (B2, MAX_MERGE_NUMS, BOX_SIZE), jnp.float32)
    merge_boxes2 = jax.block_until_ready(mergenet_forward(x2, params))
    assert merge_boxes2.shape == (B2, 1, BOX_SIZE)
    assert jnp.allclose(merge_boxes2, _mergenet_ref(x2, params),
                        atol=3e-2, rtol=3e-2)
    assert bool(jnp.isfinite(merge_boxes2).all())

    print("KERNEL_OK")
</pallas_src>

<mosaic_0001>
module attributes {stable_mosaic.version = 11 : i64} {
  func.func @_mergenet_kernel(%arg0: i32, %arg1: memref<8x128xbf16, #tpu.memory_space<vmem>>, %arg2: memref<16x8xbf16, #tpu.memory_space<vmem>>, %arg3: memref<16x1xf32, #tpu.memory_space<vmem>>, %arg4: memref<16x16xbf16, #tpu.memory_space<vmem>>, %arg5: memref<16x1xf32, #tpu.memory_space<vmem>>, %arg6: memref<1x16xbf16, #tpu.memory_space<vmem>>, %arg7: memref<1x1xf32, #tpu.memory_space<vmem>>, %arg8: memref<1x128xf32, #tpu.memory_space<vmem>>) attributes {dimension_semantics = [#tpu.dimension_semantics<parallel>], iteration_bounds = array<i64: 1>, scalar_prefetch = 0 : i64, scratch_operands = 0 : i64, tpu.core_type = #tpu.core_type<tc>, window_params = [{transform_indices = @transform_0, window_bounds = array<i64: 8, 128>}, {pipeline_mode = #tpu.pipeline_mode<synchronous>, transform_indices = @transform_1, window_bounds = array<i64: 16, 8>}, {pipeline_mode = #tpu.pipeline_mode<synchronous>, transform_indices = @transform_2, window_bounds = array<i64: 16, 1>}, {pipeline_mode = #tpu.pipeline_mode<synchronous>, transform_indices = @transform_3, window_bounds = array<i64: 16, 16>}, {pipeline_mode = #tpu.pipeline_mode<synchronous>, transform_indices = @transform_4, window_bounds = array<i64: 16, 1>}, {pipeline_mode = #tpu.pipeline_mode<synchronous>, transform_indices = @transform_5, window_bounds = array<i64: 1, 16>}, {pipeline_mode = #tpu.pipeline_mode<synchronous>, transform_indices = @transform_6, window_bounds = array<i64: 1, 1>}, {transform_indices = @transform_7, window_bounds = array<i64: 1, 128>}]} {
    %c0 = arith.constant 0 : index
    %c0_0 = arith.constant 0 : index
    %0 = vector.load %arg1[%c0, %c0_0] : memref<8x128xbf16, #tpu.memory_space<vmem>>, vector<8x128xbf16>
    %c0_1 = arith.constant 0 : index
    %c0_2 = arith.constant 0 : index
    %1 = vector.load %arg2[%c0_1, %c0_2] : memref<16x8xbf16, #tpu.memory_space<vmem>>, vector<16x8xbf16>
    %cst = arith.constant dense<0.000000e+00> : vector<16x128xf32>
    %2 = tpu.matmul %1, %0, %cst {dimension_numbers = #tpu.dot_dimension_numbers<[1], [0], [0], [1], [0, 0, 1, 1], [], []>} : vector<16x8xbf16>, vector<8x128xbf16>, vector<16x128xf32> -> vector<16x128xf32>
    %c0_3 = arith.constant 0 : index
    %c0_4 = arith.constant 0 : index
    %3 = vector.load %arg3[%c0_3, %c0_4] : memref<16x1xf32, #tpu.memory_space<vmem>>, vector<16x1xf32>
    %4 = vector.broadcast %3 : vector<16x1xf32> to vector<16x128xf32>
    %5 = arith.addf %2, %4 : vector<16x128xf32>
    %cst_5 = arith.constant 0.000000e+00 : f32
    %6 = vector.broadcast %cst_5 : f32 to vector<16x128xf32>
    %7 = arith.maximumf %5, %6 : vector<16x128xf32>
    %c0_6 = arith.constant 0 : index
    %c0_7 = arith.constant 0 : index
    %8 = vector.load %arg4[%c0_6, %c0_7] : memref<16x16xbf16, #tpu.memory_space<vmem>>, vector<16x16xbf16>
    %9 = arith.truncf %7 : vector<16x128xf32> to vector<16x128xbf16>
    %cst_8 = arith.constant dense<0.000000e+00> : vector<16x128xf32>
    %10 = tpu.matmul %8, %9, %cst_8 {dimension_numbers = #tpu.dot_dimension_numbers<[1], [0], [0], [1], [0, 0, 1, 1], [], []>} : vector<16x16xbf16>, vector<16x128xbf16>, vector<16x128xf32> -> vector<16x128xf32>
    %c0_9 = arith.constant 0 : index
    %c0_10 = arith.constant 0 : index
    %11 = vector.load %arg5[%c0_9, %c0_10] : memref<16x1xf32, #tpu.memory_space<vmem>>, vector<16x1xf32>
    %12 = vector.broadcast %11 : vector<16x1xf32> to vector<16x128xf32>
    %13 = arith.addf %10, %12 : vector<16x128xf32>
    %cst_11 = arith.constant 0.000000e+00 : f32
    %14 = vector.broadcast %cst_11 : f32 to vector<16x128xf32>
    %15 = arith.maximumf %13, %14 : vector<16x128xf32>
    %c0_12 = arith.constant 0 : index
    %c0_13 = arith.constant 0 : index
    %16 = vector.load %arg6[%c0_12, %c0_13] : memref<1x16xbf16, #tpu.memory_space<vmem>>, vector<1x16xbf16>
    %17 = arith.truncf %15 : vector<16x128xf32> to vector<16x128xbf16>
    %cst_14 = arith.constant dense<0.000000e+00> : vector<1x128xf32>
    %18 = tpu.matmul %16, %17, %cst_14 {dimension_numbers = #tpu.dot_dimension_numbers<[1], [0], [0], [1], [0, 0, 1, 1], [], []>} : vector<1x16xbf16>, vector<16x128xbf16>, vector<1x128xf32> -> vector<1x128xf32>
    %c0_15 = arith.constant 0 : index
    %c0_16 = arith.constant 0 : index
    %19 = vector.load %arg7[%c0_15, %c0_16] : memref<1x1xf32, #tpu.memory_space<vmem>>, vector<1x1xf32>
    %20 = vector.broadcast %19 : vector<1x1xf32> to vector<1x128xf32>
    %21 = arith.addf %18, %20 : vector<1x128xf32>
    %c0_17 = arith.constant 0 : index
    %c0_18 = arith.constant 0 : index
    %22 = vector.load %arg8[%c0_17, %c0_18] : memref<1x128xf32, #tpu.memory_space<vmem>>, vector<1x128xf32>
    tpu.vector_store %arg8[%c0_17, %c0_18], %21 {strides = array<i32>} : memref<1x128xf32, #tpu.memory_space<vmem>>, vector<1x128xf32>,
    return
  }
  func.func @transform_0(%arg0: i32) -> (i32, i32) {
    %c0_i32 = arith.constant 0 : i32
    %c0_i32_0 = arith.constant 0 : i32
    return %c0_i32, %arg0 : i32, i32
  }
  func.func @transform_1(%arg0: i32) -> (i32, i32) {
    %c0_i32 = arith.constant 0 : i32
    %c0_i32_0 = arith.constant 0 : i32
    %c0_i32_1 = arith.constant 0 : i32
    return %c0_i32, %c0_i32_0 : i32, i32
  }
  func.func @transform_2(%arg0: i32) -> (i32, i32) {
    %c0_i32 = arith.constant 0 : i32
    %c0_i32_0 = arith.constant 0 : i32
    %c0_i32_1 = arith.constant 0 : i32
    return %c0_i32, %c0_i32_0 : i32, i32
  }
  func.func @transform_3(%arg0: i32) -> (i32, i32) {
    %c0_i32 = arith.constant 0 : i32
    %c0_i32_0 = arith.constant 0 : i32
    %c0_i32_1 = arith.constant 0 : i32
    return %c0_i32, %c0_i32_0 : i32, i32
  }
  func.func @transform_4(%arg0: i32) -> (i32, i32) {
    %c0_i32 = arith.constant 0 : i32
    %c0_i32_0 = arith.constant 0 : i32
    %c0_i32_1 = arith.constant 0 : i32
    return %c0_i32, %c0_i32_0 : i32, i32
  }
  func.func @transform_5(%arg0: i32) -> (i32, i32) {
    %c0_i32 = arith.constant 0 : i32
    %c0_i32_0 = arith.constant 0 : i32
    %c0_i32_1 = arith.constant 0 : i32
    return %c0_i32, %c0_i32_0 : i32, i32
  }
  func.func @transform_6(%arg0: i32) -> (i32, i32) {
    %c0_i32 = arith.constant 0 : i32
    %c0_i32_0 = arith.constant 0 : i32
    %c0_i32_1 = arith.constant 0 : i32
    return %c0_i32, %c0_i32_0 : i32, i32
  }
  func.func @transform_7(%arg0: i32) -> (i32, i32) {
    %c0_i32 = arith.constant 0 : i32
    %c0_i32_0 = arith.constant 0 : i32
    return %c0_i32, %arg0 : i32, i32
  }
}

</mosaic_0001>

<llo_original>
// kernel: tpu_custom_call.1
$region0: #{tpu_custom_call.1}
  #allocation0 [shape = 'u32[]', space=smem, size = 0x4, offset = 0x4, fixed_abs, tag = 'smem constant byte address 0x4 - core index']
  #allocation1 [shape = 'u32[72,128]{1,0:T(1,128)}', space=vmem, size = 0x9000, scoped, tag = 'internal scratch']
  #allocation2 [shape = 'f32[1,1]{1,0:T(1,128)S(1)}', space=vmem, size = 0x200, scoped, tag = 'scoped memory for tpu_custom_call.1']
  %s0 = inlined_call_operand.vmem [shape: bf16[8,28], index: 0, kind: input, shape index: {}]
  %s1 = inlined_call_operand.vmem [shape: bf16[16,8], index: 1, kind: input, shape index: {}]
  %s2 = inlined_call_operand.vmem [shape: f32[16,1], index: 2, kind: input, shape index: {}]
  %s3 = inlined_call_operand.vmem [shape: bf16[16,16], index: 3, kind: input, shape index: {}]
  %s4 = inlined_call_operand.vmem [shape: f32[16,1], index: 4, kind: input, shape index: {}]
  %s5 = inlined_call_operand.vmem [shape: bf16[1,16], index: 5, kind: input, shape index: {}]
  %s6 = inlined_call_operand.<no memory space> [shape: f32[1,1], index: 6, kind: input, shape index: {}]
  %s7 = inlined_call_operand.hbm [shape: f32[1,28], index: 7, kind: output, shape index: {}]
  %s8 = sld [smem:[#allocation0]]
  $region38: #{tpu_custom_call.1} parent=0
    _
  %s10 = ssub.s32 1, %s8
  %s11 = scalar_select 0, %s10, %s8
  %v12 = vstv %s6
  %13 = vst [vmem:[#allocation2] sm:$0x1] %v12
  $region1: #{tpu_custom_call.1} parent=0
    #allocation3 [shape = 'u8[512]{0}', space=vmem, size = 0x400, scoped, tag = 'output window, operand 0, single buffered']
    #allocation4 [shape = 's32[1]{0}', space=sflag, size = 0x4, scoped, tag = 'scoped memory for tpu_custom_call.1']
    %14 = vsyncpa [#allocation4], 0
    // Predicated region
    $region2: #{tpu_custom_call.1} parent=1 // pred_check
      _
    $region3: #{tpu_custom_call.1} parent=1 // pred_check_branch
      %16 = sbr.rel (0) target = $region5
    $region4: #{tpu_custom_call.1} parent=1 // pred_region
      _
    $region5: #{tpu_custom_call.1} parent=1 // pred_fallthru
      _
    // Predicated region
    $region6: #{tpu_custom_call.1} parent=1 // pred_check
      _
    $region7: #{tpu_custom_call.1} parent=1 // pred_check_branch
      %18 = sbr.rel (0) target = $region9
    $region8: #{tpu_custom_call.1} parent=1 // pred_region
      _
    $region9: #{tpu_custom_call.1} parent=1 // pred_fallthru
      _
    // Predicated region
    $region10: #{tpu_custom_call.1} parent=1 // pred_check
      _
    $region11: #{tpu_custom_call.1} parent=1 // pred_check_branch
      %20 = sbr.rel (0) target = $region13
    $region12: #{tpu_custom_call.1} parent=1 // pred_region
      _
    $region13: #{tpu_custom_call.1} parent=1 // pred_fallthru
      _
    // Predicated region
    $region14: #{tpu_custom_call.1} parent=1 // pred_check
      _
    $region15: #{tpu_custom_call.1} parent=1 // pred_check_branch
      %22 = sbr.rel (0) target = $region17
    $region16: #{tpu_custom_call.1} parent=1 // pred_region
      _
    $region17: #{tpu_custom_call.1} parent=1 // pred_fallthru
      _
    // Predicated region
    $region18: #{tpu_custom_call.1} parent=1 // pred_check
      _
    $region19: #{tpu_custom_call.1} parent=1 // pred_check_branch
      %24 = sbr.rel (0) target = $region21
    $region20: #{tpu_custom_call.1} parent=1 // pred_region
      _
    $region21: #{tpu_custom_call.1} parent=1 // pred_fallthru
      _
    // Predicated region
    $region22: #{tpu_custom_call.1} parent=1 // pred_check
      _
    $region23: #{tpu_custom_call.1} parent=1 // pred_check_branch
      %26 = sbr.rel (0) target = $region25
    $region24: #{tpu_custom_call.1} parent=1 // pred_region
      _
    $region25: #{tpu_custom_call.1} parent=1 // pred_fallthru
      _
    // Predicated region
    $region26: #{tpu_custom_call.1} parent=1 // pred_check
      _
    $region27: #{tpu_custom_call.1} parent=1 // pred_check_branch
      %28 = sbr.rel (0) target = $region29
    $region28: #{tpu_custom_call.1} parent=1 // pred_region
      _
    $region29: #{tpu_custom_call.1} parent=1 // pred_fallthru
      _
    %v30 = vld [vmem:[%s0] sm:$0xf]
    %v31 = vld [vmem:[%s1] sm:$0xf]
    %v32 = vld [vmem:[%s1 + $0x4] sm:$0xf]
    %v33 = vld [vmem:[%s2] sm:$0xff]
    %v34 = vld [vmem:[%s2 + $0x8] sm:$0xff]
    %36 = vset.pattern.permute.xlu0 0
    %37 = vperm.xlu0 %36, %v33
    %v38 = vpop.permute.xlu0 %37
    %41 = vset.pattern.permute.xlu0 0
    %42 = vperm.xlu0 %41, %v34
    %v43 = vpop.permute.xlu0 %42
    %v47 = vunpack.c.l.b16 %v31
    %v48 = vunpack.c.l.b16 %v32
    %v49 = vpack.c.b16 %v48, %v47
    %vm50 = vcmask 64512
    %v52 = vsel %vm50, %v49, 0
    %vm54 = vcmask 1043456
    %v56 = vsel %vm54, %v30, 0
    %58 = vmatpush.bf16.msra.mxu0 0
    %59 = vmatpush.bf16.msra.mxu0 0
    %60 = vmatpush.bf16.msra.mxu0 0
    %61 = vmatpush.bf16.msra.mxu0 0
    %62 = vmatpush.bf16.msra.mxu0 0
    %63 = vmatpush.bf16.msra.mxu0 0
    %64 = vmatpush.bf16.msra.mxu0 0
    %65 = vmatpush.bf16.msra.mxu0 %v56
    %66 = vmatmul.bf16.gmra.mxu0 %v52
    %v67 = vpop.f32.mrf.mxu0
    %v68 = vadd.f32 %v38, %v67
    %v69 = vpop.f32.mrf.mxu0
    %v70 = vadd.f32 %v43, %v69
    %71 = vdwg.mxu0
    %v72 = vmax.f32 %v68, 0.0
    %v73 = vmax.f32 %v70, 0.0
    %v74 = vld [vmem:[%s3] sm:$0xf]
    %v75 = vld [vmem:[%s3 + $0x4] sm:$0xf]
    %v76 = vpack.c.bf16 %v73, %v72
    %v77 = vld [vmem:[%s4] sm:$0xff]
    %v78 = vld [vmem:[%s4 + $0x8] sm:$0xff]
    %80 = vset.pattern.permute.xlu0 0
    %81 = vperm.xlu0 %80, %v77
    %v82 = vpop.permute.xlu0 %81
    %85 = vset.pattern.permute.xlu0 0
    %86 = vperm.xlu0 %85, %v78
    %v87 = vpop.permute.xlu0 %86
    %v91 = vunpack.c.l.b16 %v74
    %v92 = vunpack.c.l.b16 %v75
    %v93 = vpack.c.b16 %v92, %v91
    %vm94 = vcmask 130048
    %v96 = vsel %vm94, %v93, 0
    %98 = vmatpush.bf16.msra.mxu0 0
    %99 = vmatpush.bf16.msra.mxu0 0
    %100 = vmatpush.bf16.msra.mxu0 0
    %101 = vmatpush.bf16.msra.mxu0 0
    %102 = vmatpush.bf16.msra.mxu0 0
    %103 = vmatpush.bf16.msra.mxu0 0
    %104 = vmatpush.bf16.msra.mxu0 0
    %105 = vmatpush.bf16.msra.mxu0 %v76
    %106 = vmatmul.bf16.gmra.mxu0 %v96
    %v107 = vpop.f32.mrf.mxu0
    %v108 = vadd.f32 %v82, %v107
    %v109 = vpop.f32.mrf.mxu0
    %v110 = vadd.f32 %v87, %v109
    %111 = vdwg.mxu0
    %v112 = vmax.f32 %v108, 0.0
    %v113 = vmax.f32 %v110, 0.0
    %v114 = vld [vmem:[%s5] sm:$0x1]
    %v115 = vpack.c.bf16 %v113, %v112
    %v116 = vld [vmem:[#allocation2] sm:$0x1]
    %118 = vset.pattern.permute.xlu0 0
    %119 = vperm.xlu0 %118, %v116
    %v120 = vpop.permute.xlu0 %119
    %v122 = vperm.slane %v120, 0
    %v124 = vsel %vm94, %v114, 0
    %126 = vmatpush.bf16.msra.mxu0 0
    %127 = vmatpush.bf16.msra.mxu0 0
    %128 = vmatpush.bf16.msra.mxu0 0
    %129 = vmatpush.bf16.msra.mxu0 0
    %130 = vmatpush.bf16.msra.mxu0 0
    %131 = vmatpush.bf16.msra.mxu0 0
    %132 = vmatpush.bf16.msra.mxu0 0
    %133 = vmatpush.bf16.msra.mxu0 %v115
    %134 = vmatmul.bf16.gmra.mxu0 %v124
    %v135 = vpop.f32.mrf.mxu0
    %v136 = vadd.f32 %v122, %v135
    %v137 = vpop.f32.mrf.mxu0
    %138 = vdwg.mxu0
    %139 = vst [vmem:[#allocation3] sm:$0x1] %v136
    // Predicated region
    $region30: #{tpu_custom_call.1} parent=1 // pred_check
      _
    $region31: #{tpu_custom_call.1} parent=1 // pred_check_branch
      %141 = sbr.rel (0) target = $region33
    $region32: #{tpu_custom_call.1} parent=1 // pred_region
      %143 = vsyncadd [#allocation4], 0
      %s145 = sshll.u32 [#allocation3], 4
      %s146 = int_to_ptr.vmem [resolvable:$true] %s145
      %s147 = sshll.u32 %s7, 4
      %s148 = int_to_ptr.hbm [resolvable:$true] %s147
      %150 = dma.vmem_to_hbm [thread:$0]  %s146, 16, %s148, [#allocation4]
    $region33: #{tpu_custom_call.1} parent=1 // pred_fallthru
      _
    // Predicated region
    $region34: #{tpu_custom_call.1} parent=1 // pred_check
      _
    $region35: #{tpu_custom_call.1} parent=1 // pred_check_branch
      %152 = sbr.rel (0) target = $region37
    $region36: #{tpu_custom_call.1} parent=1 // pred_region
      %154 = dma.done [#allocation4], 16
    $region37: #{tpu_custom_call.1} parent=1 // pred_fallthru
      _
    %155 = vsyncpa [#allocation4], 1

</llo_original>
